<compile_context>
chip_gen: v7x
topology: tpu7x:2x2x1
jax: 0.10.0
libtpu: 0.0.40
codegen_flags: <defaults>
</compile_context>

<pallas_src>
import functools

import jax
import jax.numpy as jnp
from jax.experimental import pallas as pl
from jax.experimental.pallas import tpu as pltpu

# Hyperparameters (hp.model.*) — small, deterministic, chosen in-script.
NUM_MELS = 32
PRENET_DIM = 64
DIM_MODEL = 128
P_DECODER_DROPOUT = 0.1

# Default row-tile size (multiple of 8; ~0.5 MB of live tile data per buffer).
DEFAULT_TM = 512


def prenet_kernel(x_ref, bits_ref,
                  w1_ref, b1_ref,
                  w2_ref, b2_ref,
                  w3_ref, b3_ref,
                  o_ref,
                  *, drop_threshold):
    """One (TM, ·) row tile: fc1->ReLU->drop, fc2->ReLU->drop, linear.

    The 1/(1-p) inverted-dropout scale is pre-folded into w2/w3 by the
    wrapper, so dropout here is a pure compare+select against precomputed
    random bits (low/high 16-bit fields of one u32 per hidden unit).
    """
    x = x_ref[...]
    bits = bits_ref[...]

    keep1 = (bits & jnp.uint32(0xFFFF)) >= jnp.uint32(drop_threshold)
    keep2 = (bits >> jnp.uint32(16)) >= jnp.uint32(drop_threshold)

    # fc1 -> ReLU -> dropout (mask only; scale folded into w2)
    h = jnp.dot(x, w1_ref[...], preferred_element_type=jnp.float32) + b1_ref[...]
    h = jnp.maximum(h, 0.0)
    h = jnp.where(keep1, h, 0.0)

    # fc2 -> ReLU -> dropout (mask only; scale folded into w3)
    h = jnp.dot(h, w2_ref[...], preferred_element_type=jnp.float32) + b2_ref[...]
    h = jnp.maximum(h, 0.0)
    h = jnp.where(keep2, h, 0.0)

    # final linear
    y = jnp.dot(h, w3_ref[...], preferred_element_type=jnp.float32) + b3_ref[...]
    o_ref[...] = y.astype(o_ref.dtype)


def decoder_prenet(x, params, *, key, dropout_p=P_DECODER_DROPOUT, tm=DEFAULT_TM):
    """x: (B, T, num_mels) float32 -> (B, T, dim_model) float32.

    Dropout is always applied (matches the PyTorch module, which has no
    train/eval switch here — Tacotron-style prenet keeps dropout at inference).
    """
    B, T, F_in = x.shape
    assert F_in == NUM_MELS
    M = B * T
    x2d = x.reshape(M, F_in)

    w1, b1, w2, b2, w3, b3 = params

    # Fold the inverted-dropout scale into the *next* layer's weights.
    inv_keep = jnp.float32(1.0 / (1.0 - dropout_p))
    w2s = w2 * inv_keep
    w3s = w3 * inv_keep
    # Drop probability as a 16-bit threshold (element dropped iff bits < thr).
    drop_threshold = int(round(dropout_p * 65536.0))

    # One u32 draw per hidden unit supplies both dropout masks (lo/hi 16 bits).
    bits = jax.random.bits(key, (M, PRENET_DIM), dtype=jnp.uint32)

    # Tile size: use the big pipelined tile for large M, shrink (to a multiple
    # of 8) for tiny decode-time M to avoid pointless grid overhead.
    tm = min(tm, max(8, ((M + 7) // 8) * 8))
    grid = (pl.cdiv(M, tm),)

    flops = 2 * M * (NUM_MELS * PRENET_DIM
                     + PRENET_DIM * PRENET_DIM
                     + PRENET_DIM * DIM_MODEL)
    param_bytes = 4 * (NUM_MELS * PRENET_DIM + PRENET_DIM
                       + PRENET_DIM * PRENET_DIM + PRENET_DIM
                       + PRENET_DIM * DIM_MODEL + DIM_MODEL)
    bytes_accessed = 4 * M * (NUM_MELS + PRENET_DIM + DIM_MODEL) + param_bytes
    cost = pl.CostEstimate(flops=flops, transcendentals=0,
                           bytes_accessed=bytes_accessed)

    row_spec = lambda nf: pl.BlockSpec((tm, nf), lambda i: (i, 0))
    const_spec = lambda r, c: pl.BlockSpec((r, c), lambda i: (0, 0))

    out2d = pl.pallas_call(
        functools.partial(prenet_kernel, drop_threshold=drop_threshold),
        out_shape=jax.ShapeDtypeStruct((M, DIM_MODEL), x.dtype),
        grid=grid,
        in_specs=[
            row_spec(NUM_MELS),                    # x tile
            row_spec(PRENET_DIM),                  # random bits tile
            const_spec(NUM_MELS, PRENET_DIM),      # w1 (resident)
            const_spec(1, PRENET_DIM),             # b1
            const_spec(PRENET_DIM, PRENET_DIM),    # w2 * 1/(1-p)
            const_spec(1, PRENET_DIM),             # b2
            const_spec(PRENET_DIM, DIM_MODEL),     # w3 * 1/(1-p)
            const_spec(1, DIM_MODEL),              # b3
        ],
        out_specs=row_spec(DIM_MODEL),
        compiler_params=pltpu.CompilerParams(
            dimension_semantics=("parallel",)),
        cost_estimate=cost,
    )(x2d, bits, w1, b1, w2s, b2, w3s, b3)

    return out2d.reshape(B, T, DIM_MODEL)


def decoder_prenet_ref(x, params, *, key, dropout_p=P_DECODER_DROPOUT):
    """Pure-JAX reference using the exact same random bits / masks."""
    B, T, _ = x.shape
    M = B * T
    x2d = x.reshape(M, NUM_MELS)
    w1, b1, w2, b2, w3, b3 = params
    bits = jax.random.bits(key, (M, PRENET_DIM), dtype=jnp.uint32)
    thr = jnp.uint32(int(round(dropout_p * 65536.0)))
    keep1 = (bits & jnp.uint32(0xFFFF)) >= thr
    keep2 = (bits >> jnp.uint32(16)) >= thr
    scale = 1.0 / (1.0 - dropout_p)
    hp_ = jax.lax.Precision.HIGHEST
    h = jnp.maximum(jnp.dot(x2d, w1, precision=hp_) + b1, 0.0)
    h = jnp.where(keep1, h, 0.0) * scale
    h = jnp.maximum(jnp.dot(h, w2, precision=hp_) + b2, 0.0)
    h = jnp.where(keep2, h, 0.0) * scale
    y = jnp.dot(h, w3, precision=hp_) + b3
    return y.reshape(B, T, DIM_MODEL)


def init_params(key):
    """PyTorch-style init; weights stored as (in, out), biases as (1, out)."""
    ks = jax.random.split(key, 6)

    def lin(kw, kb, fan_in, fan_out):
        bound = 1.0 / jnp.sqrt(fan_in)
        w = jax.random.uniform(kw, (fan_in, fan_out), jnp.float32, -bound, bound)
        b = jax.random.uniform(kb, (1, fan_out), jnp.float32, -bound, bound)
        return w, b

    w1, b1 = lin(ks[0], ks[1], NUM_MELS, PRENET_DIM)
    w2, b2 = lin(ks[2], ks[3], PRENET_DIM, PRENET_DIM)
    w3, b3 = lin(ks[4], ks[5], PRENET_DIM, DIM_MODEL)
    return (w1, b1, w2, b2, w3, b3)


if __name__ == "__main__":
    key = jax.random.PRNGKey(0)
    k_x, k_p, k_drop = jax.random.split(key, 3)

    B, T = 2, 8
    x = jax.random.normal(k_x, (B, T, NUM_MELS), dtype=jnp.float32)
    params = init_params(k_p)

    out = decoder_prenet(x, params, key=k_drop)
    jax.block_until_ready(out)

    assert out.shape == (B, T, DIM_MODEL)
    assert bool(jnp.all(jnp.isfinite(out)))

    # Sanity check against a pure-JAX reference using identical dropout masks
    # (loose tolerance to absorb MXU-vs-XLA f32 matmul rounding differences).
    ref = decoder_prenet_ref(x, params, key=k_drop)
    assert bool(jnp.allclose(out, ref, rtol=5e-2, atol=5e-2))

    print("KERNEL_OK")
</pallas_src>

<mosaic_0001>
module attributes {stable_mosaic.version = 11 : i64} {
  func.func @prenet_kernel(%arg0: i32, %arg1: memref<16x32xf32, #tpu.memory_space<vmem>>, %arg2: memref<16x64xi32, #tpu.memory_space<vmem>>, %arg3: memref<32x64xf32, #tpu.memory_space<vmem>>, %arg4: memref<1x64xf32, #tpu.memory_space<vmem>>, %arg5: memref<64x64xf32, #tpu.memory_space<vmem>>, %arg6: memref<1x64xf32, #tpu.memory_space<vmem>>, %arg7: memref<64x128xf32, #tpu.memory_space<vmem>>, %arg8: memref<1x128xf32, #tpu.memory_space<vmem>>, %arg9: memref<16x128xf32, #tpu.memory_space<vmem>>) attributes {dimension_semantics = [#tpu.dimension_semantics<parallel>], iteration_bounds = array<i64: 1>, scalar_prefetch = 0 : i64, scratch_operands = 0 : i64, tpu.core_type = #tpu.core_type<tc>, window_params = [{transform_indices = @transform_0, window_bounds = array<i64: 16, 32>}, {transform_indices = @transform_1, window_bounds = array<i64: 16, 64>}, {pipeline_mode = #tpu.pipeline_mode<synchronous>, transform_indices = @transform_2, window_bounds = array<i64: 32, 64>}, {pipeline_mode = #tpu.pipeline_mode<synchronous>, transform_indices = @transform_3, window_bounds = array<i64: 1, 64>}, {pipeline_mode = #tpu.pipeline_mode<synchronous>, transform_indices = @transform_4, window_bounds = array<i64: 64, 64>}, {pipeline_mode = #tpu.pipeline_mode<synchronous>, transform_indices = @transform_5, window_bounds = array<i64: 1, 64>}, {pipeline_mode = #tpu.pipeline_mode<synchronous>, transform_indices = @transform_6, window_bounds = array<i64: 64, 128>}, {pipeline_mode = #tpu.pipeline_mode<synchronous>, transform_indices = @transform_7, window_bounds = array<i64: 1, 128>}, {transform_indices = @transform_8, window_bounds = array<i64: 16, 128>}]} {
    %c0 = arith.constant 0 : index
    %c0_0 = arith.constant 0 : index
    %0 = vector.load %arg1[%c0, %c0_0] : memref<16x32xf32, #tpu.memory_space<vmem>>, vector<16x32xf32>
    %c0_1 = arith.constant 0 : index
    %c0_2 = arith.constant 0 : index
    %1 = vector.load %arg2[%c0_1, %c0_2] : memref<16x64xi32, #tpu.memory_space<vmem>>, vector<16x64xi32>
    %c65535_i32 = arith.constant 65535 : i32
    %2 = vector.broadcast %c65535_i32 : i32 to vector<16x64xi32>
    %3 = arith.andi %1, %2 : vector<16x64xi32>
    %c6554_i32 = arith.constant 6554 : i32
    %4 = vector.broadcast %c6554_i32 : i32 to vector<16x64xi32>
    %5 = arith.cmpi uge, %3, %4 : vector<16x64xi32>
    %c16_i32 = arith.constant 16 : i32
    %6 = vector.broadcast %c16_i32 : i32 to vector<16x64xi32>
    %7 = arith.shrui %1, %6 : vector<16x64xi32>
    %c6554_i32_3 = arith.constant 6554 : i32
    %8 = vector.broadcast %c6554_i32_3 : i32 to vector<16x64xi32>
    %9 = arith.cmpi uge, %7, %8 : vector<16x64xi32>
    %c0_4 = arith.constant 0 : index
    %c0_5 = arith.constant 0 : index
    %10 = vector.load %arg3[%c0_4, %c0_5] : memref<32x64xf32, #tpu.memory_space<vmem>>, vector<32x64xf32>
    %cst = arith.constant dense<0.000000e+00> : vector<16x64xf32>
    %11 = tpu.matmul %0, %10, %cst {dimension_numbers = #tpu.dot_dimension_numbers<[1], [0], [0], [1], [0, 0, 1, 1], [], []>} : vector<16x32xf32>, vector<32x64xf32>, vector<16x64xf32> -> vector<16x64xf32>
    %c0_6 = arith.constant 0 : index
    %c0_7 = arith.constant 0 : index
    %12 = vector.load %arg4[%c0_6, %c0_7] : memref<1x64xf32, #tpu.memory_space<vmem>>, vector<1x64xf32>
    %13 = vector.broadcast %12 : vector<1x64xf32> to vector<16x64xf32>
    %14 = arith.addf %11, %13 : vector<16x64xf32>
    %cst_8 = arith.constant 0.000000e+00 : f32
    %15 = vector.broadcast %cst_8 : f32 to vector<16x64xf32>
    %16 = arith.maximumf %14, %15 : vector<16x64xf32>
    %cst_9 = arith.constant 0.000000e+00 : f32
    %17 = vector.broadcast %cst_9 : f32 to vector<16x64xf32>
    %18 = arith.select %5, %16, %17 : vector<16x64xi1>, vector<16x64xf32>
    %c0_10 = arith.constant 0 : index
    %c0_11 = arith.constant 0 : index
    %19 = vector.load %arg5[%c0_10, %c0_11] : memref<64x64xf32, #tpu.memory_space<vmem>>, vector<64x64xf32>
    %cst_12 = arith.constant dense<0.000000e+00> : vector<16x64xf32>
    %20 = tpu.matmul %18, %19, %cst_12 {dimension_numbers = #tpu.dot_dimension_numbers<[1], [0], [0], [1], [0, 0, 1, 1], [], []>} : vector<16x64xf32>, vector<64x64xf32>, vector<16x64xf32> -> vector<16x64xf32>
    %c0_13 = arith.constant 0 : index
    %c0_14 = arith.constant 0 : index
    %21 = vector.load %arg6[%c0_13, %c0_14] : memref<1x64xf32, #tpu.memory_space<vmem>>, vector<1x64xf32>
    %22 = vector.broadcast %21 : vector<1x64xf32> to vector<16x64xf32>
    %23 = arith.addf %20, %22 : vector<16x64xf32>
    %cst_15 = arith.constant 0.000000e+00 : f32
    %24 = vector.broadcast %cst_15 : f32 to vector<16x64xf32>
    %25 = arith.maximumf %23, %24 : vector<16x64xf32>
    %cst_16 = arith.constant 0.000000e+00 : f32
    %26 = vector.broadcast %cst_16 : f32 to vector<16x64xf32>
    %27 = arith.select %9, %25, %26 : vector<16x64xi1>, vector<16x64xf32>
    %c0_17 = arith.constant 0 : index
    %c0_18 = arith.constant 0 : index
    %28 = vector.load %arg7[%c0_17, %c0_18] : memref<64x128xf32, #tpu.memory_space<vmem>>, vector<64x128xf32>
    %cst_19 = arith.constant dense<0.000000e+00> : vector<16x128xf32>
    %29 = tpu.matmul %27, %28, %cst_19 {dimension_numbers = #tpu.dot_dimension_numbers<[1], [0], [0], [1], [0, 0, 1, 1], [], []>} : vector<16x64xf32>, vector<64x128xf32>, vector<16x128xf32> -> vector<16x128xf32>
    %c0_20 = arith.constant 0 : index
    %c0_21 = arith.constant 0 : index
    %30 = vector.load %arg8[%c0_20, %c0_21] : memref<1x128xf32, #tpu.memory_space<vmem>>, vector<1x128xf32>
    %31 = vector.broadcast %30 : vector<1x128xf32> to vector<16x128xf32>
    %32 = arith.addf %29, %31 : vector<16x128xf32>
    %c0_22 = arith.constant 0 : index
    %c0_23 = arith.constant 0 : index
    %33 = vector.load %arg9[%c0_22, %c0_23] : memref<16x128xf32, #tpu.memory_space<vmem>>, vector<16x128xf32>
    tpu.vector_store %arg9[%c0_22, %c0_23], %32 {strides = array<i32>} : memref<16x128xf32, #tpu.memory_space<vmem>>, vector<16x128xf32>,
    return
  }
  func.func @transform_0(%arg0: i32) -> (i32, i32) {
    %c0_i32 = arith.constant 0 : i32
    %c0_i32_0 = arith.constant 0 : i32
    return %arg0, %c0_i32 : i32, i32
  }
  func.func @transform_1(%arg0: i32) -> (i32, i32) {
    %c0_i32 = arith.constant 0 : i32
    %c0_i32_0 = arith.constant 0 : i32
    return %arg0, %c0_i32 : i32, i32
  }
  func.func @transform_2(%arg0: i32) -> (i32, i32) {
    %c0_i32 = arith.constant 0 : i32
    %c0_i32_0 = arith.constant 0 : i32
    %c0_i32_1 = arith.constant 0 : i32
    return %c0_i32, %c0_i32_0 : i32, i32
  }
  func.func @transform_3(%arg0: i32) -> (i32, i32) {
    %c0_i32 = arith.constant 0 : i32
    %c0_i32_0 = arith.constant 0 : i32
    %c0_i32_1 = arith.constant 0 : i32
    return %c0_i32, %c0_i32_0 : i32, i32
  }
  func.func @transform_4(%arg0: i32) -> (i32, i32) {
    %c0_i32 = arith.constant 0 : i32
    %c0_i32_0 = arith.constant 0 : i32
    %c0_i32_1 = arith.constant 0 : i32
    return %c0_i32, %c0_i32_0 : i32, i32
  }
  func.func @transform_5(%arg0: i32) -> (i32, i32) {
    %c0_i32 = arith.constant 0 : i32
    %c0_i32_0 = arith.constant 0 : i32
    %c0_i32_1 = arith.constant 0 : i32
    return %c0_i32, %c0_i32_0 : i32, i32
  }
  func.func @transform_6(%arg0: i32) -> (i32, i32) {
    %c0_i32 = arith.constant 0 : i32
    %c0_i32_0 = arith.constant 0 : i32
    %c0_i32_1 = arith.constant 0 : i32
    return %c0_i32, %c0_i32_0 : i32, i32
  }
  func.func @transform_7(%arg0: i32) -> (i32, i32) {
    %c0_i32 = arith.constant 0 : i32
    %c0_i32_0 = arith.constant 0 : i32
    %c0_i32_1 = arith.constant 0 : i32
    return %c0_i32, %c0_i32_0 : i32, i32
  }
  func.func @transform_8(%arg0: i32) -> (i32, i32) {
    %c0_i32 = arith.constant 0 : i32
    %c0_i32_0 = arith.constant 0 : i32
    return %arg0, %c0_i32 : i32, i32
  }
}

</mosaic_0001>

<llo_original>
// kernel: tpu_custom_call.1
$region0: #{tpu_custom_call.1}
  #allocation0 [shape = 'u32[]', space=smem, size = 0x4, offset = 0x4, fixed_abs, tag = 'smem constant byte address 0x4 - core index']
  #allocation1 [shape = 'u32[144,128]{1,0:T(1,128)}', space=vmem, size = 0x12000, scoped, tag = 'internal scratch']
  %s0 = inlined_call_operand.hbm [shape: f32[16,32], index: 0, kind: input, shape index: {}]
  %s1 = inlined_call_operand.hbm [shape: u32[16,64], index: 1, kind: input, shape index: {}]
  %s2 = inlined_call_operand.hbm [shape: f32[32,64], index: 2, kind: input, shape index: {}]
  %s3 = inlined_call_operand.vmem [shape: f32[1,64], index: 3, kind: input, shape index: {}]
  %s4 = inlined_call_operand.hbm [shape: f32[64,64], index: 4, kind: input, shape index: {}]
  %s5 = inlined_call_operand.vmem [shape: f32[1,64], index: 5, kind: input, shape index: {}]
  %s6 = inlined_call_operand.hbm [shape: f32[64,128], index: 6, kind: input, shape index: {}]
  %s7 = inlined_call_operand.vmem [shape: f32[1,128], index: 7, kind: input, shape index: {}]
  %s8 = inlined_call_operand.hbm [shape: f32[16,128], index: 8, kind: output, shape index: {}]
  %s9 = sld [smem:[#allocation0]]
  $region62: #{tpu_custom_call.1} parent=0
    _
  %s11 = ssub.s32 1, %s9
  %s12 = scalar_select 0, %s11, %s9
  $region1: #{tpu_custom_call.1} parent=0
    #allocation2 [shape = 'u8[8192]{0}', space=vmem, size = 0x2000, scoped, tag = 'input window, operand 0, single buffered']
    #allocation3 [shape = 's32[1]{0}', space=sflag, size = 0x4, scoped, tag = 'scoped memory for tpu_custom_call.1']
    #allocation4 [shape = 's32[1]{0}', space=sflag, size = 0x4, scoped, tag = 'scoped memory for tpu_custom_call.1']
    #allocation5 [shape = 'u8[8192]{0}', space=vmem, size = 0x2000, scoped, tag = 'input window, operand 1, single buffered']
    #allocation6 [shape = 's32[1]{0}', space=sflag, size = 0x4, scoped, tag = 'scoped memory for tpu_custom_call.1']
    #allocation7 [shape = 'u8[16384]{0}', space=vmem, size = 0x4000, scoped, tag = 'input window, operand 2, single buffered']
    #allocation8 [shape = 'u8[32768]{0}', space=vmem, size = 0x8000, scoped, tag = 'input window, operand 4, single buffered']
    #allocation9 [shape = 's32[1]{0}', space=sflag, size = 0x4, scoped, tag = 'scoped memory for tpu_custom_call.1']
    #allocation10 [shape = 'u8[32768]{0}', space=vmem, size = 0x8000, scoped, tag = 'input window, operand 6, single buffered']
    #allocation11 [shape = 'u8[8192]{0}', space=vmem, size = 0x2000, scoped, tag = 'output window, operand 0, single buffered']
    %13 = vsyncpa [#allocation3], 0
    %14 = vsyncpa [#allocation6], 0
    %15 = vsyncpa [#allocation9], 0
    %16 = vsyncpa [#allocation4], 0
    // Predicated region
    $region2: #{tpu_custom_call.1} parent=1 // pred_check
      _
    $region3: #{tpu_custom_call.1} parent=1 // pred_check_branch
      %18 = sbr.rel (0) target = $region5
    $region4: #{tpu_custom_call.1} parent=1 // pred_region
      %s20 = ssub.s32 256, 256
      %21 = vsyncadd [#allocation3], %s20
      %s22 = sshll.u32 [#allocation2], 4
      %s23 = int_to_ptr.vmem [resolvable:$true] %s22
      %28 = dma.hbm_to_vmem [thread:$0]  %s0, 256, %s23, [#allocation3], 128, 128, 8
    $region5: #{tpu_custom_call.1} parent=1 // pred_fallthru
      _
    // Predicated region
    $region6: #{tpu_custom_call.1} parent=1 // pred_check
      _
    $region7: #{tpu_custom_call.1} parent=1 // pred_check_branch
      %30 = sbr.rel (0) target = $region9
    $region8: #{tpu_custom_call.1} parent=1 // pred_region
      %s32 = ssub.s32 256, 256
      %33 = vsyncadd [#allocation6], %s32
      %s34 = sshll.u32 [#allocation5], 4
      %s35 = int_to_ptr.vmem [resolvable:$true] %s34
      %40 = dma.hbm_to_vmem [thread:$0]  %s1, 256, %s35, [#allocation6], 128, 128, 8
    $region9: #{tpu_custom_call.1} parent=1 // pred_fallthru
      _
    // Predicated region
    $region10: #{tpu_custom_call.1} parent=1 // pred_check
      _
    $region11: #{tpu_custom_call.1} parent=1 // pred_check_branch
      %42 = sbr.rel (0) target = $region13
    $region12: #{tpu_custom_call.1} parent=1 // pred_region
      %s44 = ssub.s32 512, 512
      %45 = vsyncadd [#allocation6], %s44
      %s46 = sshll.u32 [#allocation7], 4
      %s47 = int_to_ptr.vmem [resolvable:$true] %s46
      %52 = dma.hbm_to_vmem [thread:$0]  %s2, 512, %s47, [#allocation6], 128, 128, 8
    $region13: #{tpu_custom_call.1} parent=1 // pred_fallthru
      _
    // Predicated region
    $region14: #{tpu_custom_call.1} parent=1 // pred_check
      _
    $region15: #{tpu_custom_call.1} parent=1 // pred_check_branch
      %54 = sbr.rel (0) target = $region17
    $region16: #{tpu_custom_call.1} parent=1 // pred_region
      _
    $region17: #{tpu_custom_call.1} parent=1 // pred_fallthru
      _
    // Predicated region
    $region18: #{tpu_custom_call.1} parent=1 // pred_check
      _
    $region19: #{tpu_custom_call.1} parent=1 // pred_check_branch
      %56 = sbr.rel (0) target = $region21
    $region20: #{tpu_custom_call.1} parent=1 // pred_region
      %s58 = ssub.s32 1024, 1024
      %59 = vsyncadd [#allocation9], %s58
      %s60 = sshll.u32 [#allocation8], 4
      %s61 = int_to_ptr.vmem [resolvable:$true] %s60
      %66 = dma.hbm_to_vmem [thread:$0]  %s4, 1024, %s61, [#allocation9], 128, 128, 8
    $region21: #{tpu_custom_call.1} parent=1 // pred_fallthru
      _
    // Predicated region
    $region22: #{tpu_custom_call.1} parent=1 // pred_check
      _
    $region23: #{tpu_custom_call.1} parent=1 // pred_check_branch
      %68 = sbr.rel (0) target = $region25
    $region24: #{tpu_custom_call.1} parent=1 // pred_region
      _
    $region25: #{tpu_custom_call.1} parent=1 // pred_fallthru
      _
    // Predicated region
    $region26: #{tpu_custom_call.1} parent=1 // pred_check
      _
    $region27: #{tpu_custom_call.1} parent=1 // pred_check_branch
      %70 = sbr.rel (0) target = $region29
    $region28: #{tpu_custom_call.1} parent=1 // pred_region
      %s72 = ssub.s32 1024, 1024
      %73 = vsyncadd [#allocation9], %s72
      %s74 = sshll.u32 [#allocation10], 4
      %s75 = int_to_ptr.vmem [resolvable:$true] %s74
      %80 = dma.hbm_to_vmem [thread:$0]  %s6, 1024, %s75, [#allocation9], 128, 128, 8
    $region29: #{tpu_custom_call.1} parent=1 // pred_fallthru
      _
    // Predicated region
    $region30: #{tpu_custom_call.1} parent=1 // pred_check
      _
    $region31: #{tpu_custom_call.1} parent=1 // pred_check_branch
      %82 = sbr.rel (0) target = $region33
    $region32: #{tpu_custom_call.1} parent=1 // pred_region
      _
    $region33: #{tpu_custom_call.1} parent=1 // pred_fallthru
      _
    // Predicated region
    $region34: #{tpu_custom_call.1} parent=1 // pred_check
      _
    $region35: #{tpu_custom_call.1} parent=1 // pred_check_branch
      %84 = sbr.rel (0) target = $region37
    $region36: #{tpu_custom_call.1} parent=1 // pred_region
      %85 = dma.done [#allocation3], 256
    $region37: #{tpu_custom_call.1} parent=1 // pred_fallthru
      _
    // Predicated region
    $region38: #{tpu_custom_call.1} parent=1 // pred_check
      _
    $region39: #{tpu_custom_call.1} parent=1 // pred_check_branch
      %87 = sbr.rel (0) target = $region41
    $region40: #{tpu_custom_call.1} parent=1 // pred_region
      %88 = dma.done [#allocation6], 256
    $region41: #{tpu_custom_call.1} parent=1 // pred_fallthru
      _
    // Predicated region
    $region42: #{tpu_custom_call.1} parent=1 // pred_check
      _
    $region43: #{tpu_custom_call.1} parent=1 // pred_check_branch
      %90 = sbr.rel (0) target = $region45
    $region44: #{tpu_custom_call.1} parent=1 // pred_region
      %91 = dma.done [#allocation6], 512
    $region45: #{tpu_custom_call.1} parent=1 // pred_fallthru
      _
    // Predicated region
    $region46: #{tpu_custom_call.1} parent=1 // pred_check
      _
    $region47: #{tpu_custom_call.1} parent=1 // pred_check_branch
      %93 = sbr.rel (0) target = $region49
    $region48: #{tpu_custom_call.1} parent=1 // pred_region
      %94 = dma.done [#allocation9], 1024
    $region49: #{tpu_custom_call.1} parent=1 // pred_fallthru
      _
    // Predicated region
    $region50: #{tpu_custom_call.1} parent=1 // pred_check
      _
    $region51: #{tpu_custom_call.1} parent=1 // pred_check_branch
      %96 = sbr.rel (0) target = $region53
    $region52: #{tpu_custom_call.1} parent=1 // pred_region
      %97 = dma.done [#allocation9], 1024
    $region53: #{tpu_custom_call.1} parent=1 // pred_fallthru
      _
    %v98 = vld [vmem:[#allocation2] sm:$0xff]
    %v99 = vld [vmem:[#allocation2 + $0x8] sm:$0xff]
    %v100 = vld [vmem:[#allocation5] sm:$0xff]
    %v101 = vld [vmem:[#allocation5 + $0x8] sm:$0xff]
    %v102 = vand.u32 %v100, 65535
    %v103 = vand.u32 %v101, 65535
    %vm104 = vcmp.ge.u32.totalorder %v102, 6554
    %vm105 = vcmp.ge.u32.totalorder %v103, 6554
    %v106 = vshrl.u32 %v100, 16
    %v107 = vshrl.u32 %v101, 16
    %vm108 = vcmp.ge.u32.totalorder %v106, 6554
    %vm109 = vcmp.ge.u32.totalorder %v107, 6554
    %v110 = vld [vmem:[#allocation7] sm:$0xff]
    %v111 = vld [vmem:[#allocation7 + $0x8] sm:$0xff]
    %v112 = vld [vmem:[#allocation7 + $0x10] sm:$0xff]
    %v113 = vld [vmem:[#allocation7 + $0x18] sm:$0xff]
    %v114 = vld [vmem:[%s3] sm:$0x1]
    %v116 = vlaneseq
    %v117 = vshrl.u32 %v116, 7
    %v118 = vsub.s32 0, %v117
    %v119 = vrot.slane %v114, %v118
    %vm121 = vcmask 261120
    %v123 = vsel %vm121, %v98, 0
    %v126 = vsel %vm121, %v99, 0
    %128 = vmatprep.subr.mxu0 0.0
    %129 = vmatpush1.msra.mxu0 %v110
    %130 = vmatprep.subr.mxu0 0.0
    %131 = vmatpush1.msra.mxu0 %v111
    %132 = vmatprep.subr.mxu0 0.0
    %133 = vmatpush1.msra.mxu0 %v112
    %134 = vmatprep.subr.mxu0 0.0
    %135 = vmatpush1.msra.mxu0 %v113
    %136 = vmatprep.subr.mxu0 0.0
    %137 = vmatpush1.msra.mxu0 0.0
    %138 = vmatprep.subr.mxu0 0.0
    %139 = vmatpush1.msra.mxu0 0.0
    %140 = vmatprep.subr.mxu0 0.0
    %141 = vmatpush1.msra.mxu0 0.0
    %142 = vmatprep.subr.mxu0 0.0
    %143 = vmatpush1.msra.mxu0 0.0
    %144 = vmatprep.subr.mxu0 0.0
    %145 = vmatpush1.msra.mxu0 0.0
    %146 = vmatprep.subr.mxu0 0.0
    %147 = vmatpush1.msra.mxu0 0.0
    %148 = vmatprep.subr.mxu0 0.0
    %149 = vmatpush1.msra.mxu0 0.0
    %150 = vmatprep.subr.mxu0 0.0
    %151 = vmatpush1.msra.mxu0 0.0
    %152 = vmatprep.subr.mxu0 0.0
    %153 = vmatpush1.msra.mxu0 0.0
    %154 = vmatprep.subr.mxu0 0.0
    %155 = vmatpush1.msra.mxu0 0.0
    %156 = vmatprep.subr.mxu0 0.0
    %157 = vmatpush1.msra.mxu0 0.0
    %158 = vmatprep.subr.mxu0 0.0
    %159 = vmatpush1.msra.mxu0 0.0
    %160 = vmatprep.subr.mxu0 0.0
    %161 = vmatpush1.msra.mxu0 0.0
    %162 = vmatprep.subr.mxu0 0.0
    %163 = vmatpush1.msra.mxu0 0.0
    %164 = vmatprep.subr.mxu0 0.0
    %165 = vmatpush1.msra.mxu0 0.0
    %166 = vmatprep.subr.mxu0 0.0
    %167 = vmatpush1.msra.mxu0 0.0
    %168 = vmatprep.subr.mxu0 0.0
    %169 = vmatpush1.msra.mxu0 0.0
    %170 = vmatprep.subr.mxu0 0.0
    %171 = vmatpush1.msra.mxu0 0.0
    %172 = vmatprep.subr.mxu0 0.0
    %173 = vmatpush1.msra.mxu0 0.0
    %174 = vmatprep.subr.mxu0 0.0
    %175 = vmatpush1.msra.mxu0 0.0
    %176 = vmatprep.subr.mxu0 0.0
    %177 = vmatpush1.msra.mxu0 0.0
    %178 = vmatprep.subr.mxu0 0.0
    %179 = vmatpush1.msra.mxu0 0.0
    %180 = vmatprep.subr.mxu0 0.0
    %181 = vmatpush1.msra.mxu0 0.0
    %182 = vmatprep.subr.mxu0 0.0
    %183 = vmatpush1.msra.mxu0 0.0
    %184 = vmatprep.subr.mxu0 0.0
    %185 = vmatpush1.msra.mxu0 0.0
    %186 = vmatprep.subr.mxu0 0.0
    %187 = vmatpush1.msra.mxu0 0.0
    %188 = vmatprep.subr.mxu0 0.0
    %189 = vmatpush1.msra.mxu0 0.0
    %190 = vmatprep.subr.mxu0 0.0
    %191 = vmatpush1.msra.mxu0 0.0
    %192 = vmatprep.mubr.f32.mxu0 0.0
    %193 = vmatmul.mubr.f32.gmra.mrb[0].mxu0 %v123
    %v194 = vpop.f32.mrb[0].mxu0
    %v195 = vadd.f32 %v119, %v194
    %v196 = vpop.f32.mrb[0].mxu0
    %197 = vmatprep.mubr.f32.mxu0 0.0
    %198 = vmatmul.mubr.f32.gmra.mrb[0].mxu0 %v126
    %v199 = vpop.f32.mrb[0].mxu0
    %v200 = vadd.f32 %v119, %v199
    %v201 = vpop.f32.mrb[0].mxu0
    %202 = vdwg.mxu0
    %v203 = vmax.f32 %v195, 0.0
    %v204 = vmax.f32 %v200, 0.0
    %v205 = vsel %vm104, %v203, 0.0
    %v206 = vsel %vm105, %v204, 0.0
    %v207 = vld [vmem:[#allocation8] sm:$0xff]
    %v208 = vld [vmem:[#allocation8 + $0x8] sm:$0xff]
    %v209 = vld [vmem:[#allocation8 + $0x10] sm:$0xff]
    %v210 = vld [vmem:[#allocation8 + $0x18] sm:$0xff]
    %v211 = vld [vmem:[#allocation8 + $0x20] sm:$0xff]
    %v212 = vld [vmem:[#allocation8 + $0x28] sm:$0xff]
    %v213 = vld [vmem:[#allocation8 + $0x30] sm:$0xff]
    %v214 = vld [vmem:[#allocation8 + $0x38] sm:$0xff]
    %v215 = vld [vmem:[%s5] sm:$0x1]
    %v217 = vlaneseq
    %v218 = vshrl.u32 %v217, 7
    %v219 = vsub.s32 0, %v218
    %v220 = vrot.slane %v215, %v219
    %vm222 = vcmask 523264
    %v224 = vsel %vm222, %v205, 0
    %v227 = vsel %vm222, %v206, 0
    %229 = vmatprep.subr.mxu0 0.0
    %230 = vmatpush1.msra.mxu0 %v207
    %231 = vmatprep.subr.mxu0 0.0
    %232 = vmatpush1.msra.mxu0 %v208
    %233 = vmatprep.subr.mxu0 0.0
    %234 = vmatpush1.msra.mxu0 %v209
    %235 = vmatprep.subr.mxu0 0.0
    %236 = vmatpush1.msra.mxu0 %v210
    %237 = vmatprep.subr.mxu0 0.0
    %238 = vmatpush1.msra.mxu0 %v211
    %239 = vmatprep.subr.mxu0 0.0
    %240 = vmatpush1.msra.mxu0 %v212
    %241 = vmatprep.subr.mxu0 0.0
    %242 = vmatpush1.msra.mxu0 %v213
    %243 = vmatprep.subr.mxu0 0.0
    %244 = vmatpush1.msra.mxu0 %v214
    %245 = vmatprep.subr.mxu0 0.0
    %246 = vmatpush1.msra.mxu0 0.0
    %247 = vmatprep.subr.mxu0 0.0
    %248 = vmatpush1.msra.mxu0 0.0
    %249 = vmatprep.subr.mxu0 0.0
    %250 = vmatpush1.msra.mxu0 0.0
    %251 = vmatprep.subr.mxu0 0.0
    %252 = vmatpush1.msra.mxu0 0.0
    %253 = vmatprep.subr.mxu0 0.0
    %254 = vmatpush1.msra.mxu0 0.0
    %255 = vmatprep.subr.mxu0 0.0
    %256 = vmatpush1.msra.mxu0 0.0
    %257 = vmatprep.subr.mxu0 0.0
    %258 = vmatpush1.msra.mxu0 0.0
    %259 = vmatprep.subr.mxu0 0.0
    %260 = vmatpush1.msra.mxu0 0.0
    %261 = vmatprep.subr.mxu0 0.0
    %262 = vmatpush1.msra.mxu0 0.0
    %263 = vmatprep.subr.mxu0 0.0
    %264 = vmatpush1.msra.mxu0 0.0
    %265 = vmatprep.subr.mxu0 0.0
    %266 = vmatpush1.msra.mxu0 0.0
    %267 = vmatprep.subr.mxu0 0.0
    %268 = vmatpush1.msra.mxu0 0.0
    %269 = vmatprep.subr.mxu0 0.0
    %270 = vmatpush1.msra.mxu0 0.0
    %271 = vmatprep.subr.mxu0 0.0
    %272 = vmatpush1.msra.mxu0 0.0
    %273 = vmatprep.subr.mxu0 0.0
    %274 = vmatpush1.msra.mxu0 0.0
    %275 = vmatprep.subr.mxu0 0.0
    %276 = vmatpush1.msra.mxu0 0.0
    %277 = vmatprep.subr.mxu0 0.0
    %278 = vmatpush1.msra.mxu0 0.0
    %279 = vmatprep.subr.mxu0 0.0
    %280 = vmatpush1.msra.mxu0 0.0
    %281 = vmatprep.subr.mxu0 0.0
    %282 = vmatpush1.msra.mxu0 0.0
    %283 = vmatprep.subr.mxu0 0.0
    %284 = vmatpush1.msra.mxu0 0.0
    %285 = vmatprep.subr.mxu0 0.0
    %286 = vmatpush1.msra.mxu0 0.0
    %287 = vmatprep.subr.mxu0 0.0
    %288 = vmatpush1.msra.mxu0 0.0
    %289 = vmatprep.subr.mxu0 0.0
    %290 = vmatpush1.msra.mxu0 0.0
    %291 = vmatprep.subr.mxu0 0.0
    %292 = vmatpush1.msra.mxu0 0.0
    %293 = vmatprep.mubr.f32.mxu0 0.0
    %294 = vmatmul.mubr.f32.gmra.mrb[0].mxu0 %v224
    %v295 = vpop.f32.mrb[0].mxu0
    %v296 = vadd.f32 %v220, %v295
    %v297 = vpop.f32.mrb[0].mxu0
    %298 = vmatprep.mubr.f32.mxu0 0.0
    %299 = vmatmul.mubr.f32.gmra.mrb[0].mxu0 %v227
    %v300 = vpop.f32.mrb[0].mxu0
    %v301 = vadd.f32 %v220, %v300
    %v302 = vpop.f32.mrb[0].mxu0
    %303 = vdwg.mxu0
    %v304 = vmax.f32 %v296, 0.0
    %v305 = vmax.f32 %v301, 0.0
    %v306 = vsel %vm108, %v304, 0.0
    %v307 = vsel %vm109, %v305, 0.0
    %v308 = vld [vmem:[#allocation10] sm:$0xff]
    %v309 = vld [vmem:[#allocation10 + $0x8] sm:$0xff]
    %v310 = vld [vmem:[#allocation10 + $0x10] sm:$0xff]
    %v311 = vld [vmem:[#allocation10 + $0x18] sm:$0xff]
    %v312 = vld [vmem:[#allocation10 + $0x20] sm:$0xff]
    %v313 = vld [vmem:[#allocation10 + $0x28] sm:$0xff]
    %v314 = vld [vmem:[#allocation10 + $0x30] sm:$0xff]
    %v315 = vld [vmem:[#allocation10 + $0x38] sm:$0xff]
    %v316 = vld [vmem:[%s7] sm:$0x1]
    %v318 = vlaneseq
    %v319 = vshrl.u32 %v318, 7
    %v320 = vsub.s32 0, %v319
    %v321 = vrot.slane %v316, %v320
    %v324 = vsel %vm222, %v306, 0
    %v327 = vsel %vm222, %v307, 0
    %329 = vmatprep.subr.mxu0 0.0
    %330 = vmatpush1.msra.mxu0 %v308
    %331 = vmatprep.subr.mxu0 0.0
    %332 = vmatpush1.msra.mxu0 %v309
    %333 = vmatprep.subr.mxu0 0.0
    %334 = vmatpush1.msra.mxu0 %v310
    %335 = vmatprep.subr.mxu0 0.0
    %336 = vmatpush1.msra.mxu0 %v311
    %337 = vmatprep.subr.mxu0 0.0
    %338 = vmatpush1.msra.mxu0 %v312
    %339 = vmatprep.subr.mxu0 0.0
    %340 = vmatpush1.msra.mxu0 %v313
    %341 = vmatprep.subr.mxu0 0.0
    %342 = vmatpush1.msra.mxu0 %v314
    %343 = vmatprep.subr.mxu0 0.0
    %344 = vmatpush1.msra.mxu0 %v315
    %345 = vmatprep.subr.mxu0 0.0
    %346 = vmatpush1.msra.mxu0 0.0
    %347 = vmatprep.subr.mxu0 0.0
    %348 = vmatpush1.msra.mxu0 0.0
    %349 = vmatprep.subr.mxu0 0.0
    %350 = vmatpush1.msra.mxu0 0.0
    %351 = vmatprep.subr.mxu0 0.0
    %352 = vmatpush1.msra.mxu0 0.0
    %353 = vmatprep.subr.mxu0 0.0
    %354 = vmatpush1.msra.mxu0 0.0
    %355 = vmatprep.subr.mxu0 0.0
    %356 = vmatpush1.msra.mxu0 0.0
    %357 = vmatprep.subr.mxu0 0.0
    %358 = vmatpush1.msra.mxu0 0.0
    %359 = vmatprep.subr.mxu0 0.0
    %360 = vmatpush1.msra.mxu0 0.0
    %361 = vmatprep.subr.mxu0 0.0
    %362 = vmatpush1.msra.mxu0 0.0
    %363 = vmatprep.subr.mxu0 0.0
    %364 = vmatpush1.msra.mxu0 0.0
    %365 = vmatprep.subr.mxu0 0.0
    %366 = vmatpush1.msra.mxu0 0.0
    %367 = vmatprep.subr.mxu0 0.0
    %368 = vmatpush1.msra.mxu0 0.0
    %369 = vmatprep.subr.mxu0 0.0
    %370 = vmatpush1.msra.mxu0 0.0
    %371 = vmatprep.subr.mxu0 0.0
    %372 = vmatpush1.msra.mxu0 0.0
    %373 = vmatprep.subr.mxu0 0.0
    %374 = vmatpush1.msra.mxu0 0.0
    %375 = vmatprep.subr.mxu0 0.0
    %376 = vmatpush1.msra.mxu0 0.0
    %377 = vmatprep.subr.mxu0 0.0
    %378 = vmatpush1.msra.mxu0 0.0
    %379 = vmatprep.subr.mxu0 0.0
    %380 = vmatpush1.msra.mxu0 0.0
    %381 = vmatprep.subr.mxu0 0.0
    %382 = vmatpush1.msra.mxu0 0.0
    %383 = vmatprep.subr.mxu0 0.0
    %384 = vmatpush1.msra.mxu0 0.0
    %385 = vmatprep.subr.mxu0 0.0
    %386 = vmatpush1.msra.mxu0 0.0
    %387 = vmatprep.subr.mxu0 0.0
    %388 = vmatpush1.msra.mxu0 0.0
    %389 = vmatprep.subr.mxu0 0.0
    %390 = vmatpush1.msra.mxu0 0.0
    %391 = vmatprep.subr.mxu0 0.0
    %392 = vmatpush1.msra.mxu0 0.0
    %393 = vmatprep.mubr.f32.mxu0 0.0
    %394 = vmatmul.mubr.f32.gmra.mrb[0].mxu0 %v324
    %v395 = vpop.f32.mrb[0].mxu0
    %v396 = vadd.f32 %v321, %v395
    %v397 = vpop.f32.mrb[0].mxu0
    %398 = vmatprep.mubr.f32.mxu0 0.0
    %399 = vmatmul.mubr.f32.gmra.mrb[0].mxu0 %v327
    %v400 = vpop.f32.mrb[0].mxu0
    %v401 = vadd.f32 %v321, %v400
    %v402 = vpop.f32.mrb[0].mxu0
    %403 = vdwg.mxu0
    %404 = vst [vmem:[#allocation11] sm:$0xff] %v396
    %405 = vst [vmem:[#allocation11 + $0x8] sm:$0xff] %v401
    // Predicated region
    $region54: #{tpu_custom_call.1} parent=1 // pred_check
      _
    $region55: #{tpu_custom_call.1} parent=1 // pred_check_branch
      %407 = sbr.rel (0) target = $region57
    $region56: #{tpu_custom_call.1} parent=1 // pred_region
      %s409 = ssub.s32 256, 256
      %410 = vsyncadd [#allocation4], %s409
      %s411 = sshll.u32 [#allocation11], 4
      %s412 = int_to_ptr.vmem [resolvable:$true] %s411
      %417 = dma.vmem_to_hbm [thread:$0]  %s412, 256, %s8, [#allocation4], 128, 128, 8
    $region57: #{tpu_custom_call.1} parent=1 // pred_fallthru
      _
    // Predicated region
    $region58: #{tpu_custom_call.1} parent=1 // pred_check
      _
    $region59: #{tpu_custom_call.1} parent=1 // pred_check_branch
      %419 = sbr.rel (0) target = $region61
    $region60: #{tpu_custom_call.1} parent=1 // pred_region
      %420 = dma.done [#allocation4], 256
    $region61: #{tpu_custom_call.1} parent=1 // pred_fallthru
      _
    %421 = vsyncpa [#allocation3], 1
    %422 = vsyncpa [#allocation6], 1
    %423 = vsyncpa [#allocation9], 1
    %424 = vsyncpa [#allocation4], 1

</llo_original>
